<compile_context>
chip_gen: v7x
topology: tpu7x:2x2x1
jax: 0.10.0
libtpu: 0.0.40
codegen_flags: <defaults>
</compile_context>

<pallas_src>
import functools

import jax
import jax.numpy as jnp
from jax.experimental import pallas as pl
from jax.experimental.pallas import tpu as pltpu


# ----------------------------------------------------------------------------
# Tiling helpers
# ----------------------------------------------------------------------------

def _choose_block(dim, pref, align):
    """Pick a block size <= pref for `dim`.

    Returns (block, padded_dim).  Prefers a divisor of `dim` that is a
    multiple of `align` (no padding / no wasted iterations); falls back to
    padding `dim` up to a multiple of `pref` only when no divisor exists.
    """
    if dim <= pref:
        return dim, dim                      # single full block
    b = (pref // align) * align
    while b >= align:
        if dim % b == 0:
            return b, dim
        b -= align
    padded = ((dim + pref - 1) // pref) * pref
    return pref, padded


# VMEM budget: tiles below use at most a few MiB; sized with headroom for
# v7x's 64 MiB physical VMEM (half of v5e/v6e).
_VMEM_LIMIT = 48 * 1024 * 1024


# ----------------------------------------------------------------------------
# Pallas kernels
# ----------------------------------------------------------------------------

def _matmul_bn_kernel(a_ref, b_ref, s_ref, c_ref, o_ref, acc_ref, *, relu):
    """o = relu?(A @ B * scale + bias); K is the last (reduction) grid axis."""
    k = pl.program_id(2)

    @pl.when(k == 0)
    def _():
        acc_ref[...] = jnp.zeros_like(acc_ref)

    acc_ref[...] += jnp.dot(a_ref[...], b_ref[...],
                            preferred_element_type=jnp.float32)

    @pl.when(k == pl.num_programs(2) - 1)
    def _():
        y = acc_ref[...] * s_ref[...] + c_ref[...]
        if relu:
            y = jnp.maximum(y, 0.0)
        o_ref[...] = y.astype(o_ref.dtype)


def _matmul_bn_res_kernel(a_ref, b_ref, s_ref, c_ref, id_ref, o_ref, acc_ref):
    """o = relu(A @ B * scale + bias + identity) — fused residual epilogue."""
    k = pl.program_id(2)

    @pl.when(k == 0)
    def _():
        acc_ref[...] = jnp.zeros_like(acc_ref)

    acc_ref[...] += jnp.dot(a_ref[...], b_ref[...],
                            preferred_element_type=jnp.float32)

    @pl.when(k == pl.num_programs(2) - 1)
    def _():
        y = (acc_ref[...] * s_ref[...] + c_ref[...]
             + id_ref[...].astype(jnp.float32))
        o_ref[...] = jnp.maximum(y, 0.0).astype(o_ref.dtype)


def matmul_bn(a, b, scale, bias, *, relu, identity=None,
              tm_pref=256, tn_pref=256, tk_pref=1024):
    """Tiled matmul with fused BN (+optional ReLU / residual add+ReLU).

    a:(M,K) b:(K,N) scale/bias:(N,) identity:(M,N) or None.  Inputs are cast
    to bf16 for the MXU; accumulation and epilogue are f32; output is bf16.
    """
    M, K = a.shape
    K2, N = b.shape
    assert K == K2

    tm, Mp = _choose_block(M, tm_pref, 8)
    tn, Np = _choose_block(N, tn_pref, 128)
    tk, Kp = _choose_block(K, tk_pref, 128)

    a = a.astype(jnp.bfloat16)
    b = b.astype(jnp.bfloat16)
    if Mp != M or Kp != K:
        a = jnp.pad(a, ((0, Mp - M), (0, Kp - K)))
    if Kp != K or Np != N:
        b = jnp.pad(b, ((0, Kp - K), (0, Np - N)))

    scale2 = scale.reshape(1, N).astype(jnp.float32)
    bias2 = bias.reshape(1, N).astype(jnp.float32)
    if Np != N:
        scale2 = jnp.pad(scale2, ((0, 0), (0, Np - N)))
        bias2 = jnp.pad(bias2, ((0, 0), (0, Np - N)))

    a_spec = pl.BlockSpec((tm, tk), lambda i, j, k: (i, k))
    b_spec = pl.BlockSpec((tk, tn), lambda i, j, k: (k, j))
    v_spec = pl.BlockSpec((1, tn), lambda i, j, k: (0, j))
    o_spec = pl.BlockSpec((tm, tn), lambda i, j, k: (i, j))

    if identity is None:
        kernel = functools.partial(_matmul_bn_kernel, relu=relu)
        in_specs = [a_spec, b_spec, v_spec, v_spec]
        args = (a, b, scale2, bias2)
    else:
        idm = identity.astype(jnp.bfloat16)
        if Mp != M or Np != N:
            idm = jnp.pad(idm, ((0, Mp - M), (0, Np - N)))
        kernel = _matmul_bn_res_kernel
        in_specs = [a_spec, b_spec, v_spec, v_spec, o_spec]
        args = (a, b, scale2, bias2, idm)

    out = pl.pallas_call(
        kernel,
        out_shape=jax.ShapeDtypeStruct((Mp, Np), jnp.bfloat16),
        grid_spec=pltpu.PrefetchScalarGridSpec(
            num_scalar_prefetch=0,
            grid=(Mp // tm, Np // tn, Kp // tk),
            in_specs=in_specs,
            out_specs=o_spec,
            scratch_shapes=[pltpu.VMEM((tm, tn), jnp.float32)],
        ),
        compiler_params=pltpu.CompilerParams(
            dimension_semantics=("parallel", "parallel", "arbitrary"),
            vmem_limit_bytes=_VMEM_LIMIT,
        ),
    )(*args)

    if Mp != M or Np != N:
        out = out[:M, :N]
    return out


def _max3_kernel(a_ref, b_ref, c_ref, o_ref):
    o_ref[...] = jnp.maximum(jnp.maximum(a_ref[...], b_ref[...]), c_ref[...])


def maxpool_3x3_s2(x_nhwc):
    """MaxPool2d(kernel=3, stride=2, padding=1), NHWC."""
    n, h, w, c = x_nhwc.shape
    ho = (h + 2 - 3) // 2 + 1
    wo = (w + 2 - 3) // 2 + 1
    neg_inf = float("-inf")
    xp = jnp.pad(x_nhwc, ((0, 0), (1, 1), (1, 1), (0, 0)),
                 constant_values=neg_inf)

    # Height-direction fold: 3 strided views + 2 elementwise maxima (fused by
    # XLA) — avoids materializing a 9x stacked tensor.
    rows = xp[:, 0:2 * ho - 1:2, :, :]
    rows = jnp.maximum(rows, xp[:, 1:2 * ho:2, :, :])
    rows = jnp.maximum(rows, xp[:, 2:2 * ho + 1:2, :, :])   # (n, ho, w+2, c)

    # Width-direction 3-way max in a gridded, pipelined Pallas kernel.
    views = [rows[:, :, kj:kj + 2 * wo - 1:2, :].reshape(n * ho * wo, c)
             for kj in range(3)]
    M = n * ho * wo
    tr, Mp = _choose_block(M, 512, 8)
    if Mp != M:
        views = [jnp.pad(v, ((0, Mp - M), (0, 0)), constant_values=neg_inf)
                 for v in views]

    row_spec = pl.BlockSpec((tr, c), lambda i: (i, 0))
    out = pl.pallas_call(
        _max3_kernel,
        out_shape=jax.ShapeDtypeStruct((Mp, c), x_nhwc.dtype),
        grid_spec=pltpu.PrefetchScalarGridSpec(
            num_scalar_prefetch=0,
            grid=(Mp // tr,),
            in_specs=[row_spec, row_spec, row_spec],
            out_specs=row_spec,
        ),
        compiler_params=pltpu.CompilerParams(
            dimension_semantics=("parallel",),
            vmem_limit_bytes=_VMEM_LIMIT,
        ),
    )(*views)
    if Mp != M:
        out = out[:M]
    return out.reshape(n, ho, wo, c)


# ----------------------------------------------------------------------------
# Conv2d (+ folded BN + optional ReLU / fused residual) via Pallas matmul
# ----------------------------------------------------------------------------

def conv2d_bn_act(x_nhwc, w_oihw, scale, bias, *, stride=(1, 1),
                  padding=(0, 0), dilation=(1, 1), relu=True, identity=None):
    n, h, w, cin = x_nhwc.shape
    cout, _, kh, kw = w_oihw.shape
    sh, sw = stride
    ph, pw = padding
    dh, dw = dilation
    ho = (h + 2 * ph - dh * (kh - 1) - 1) // sh + 1
    wo = (w + 2 * pw - dw * (kw - 1) - 1) // sw + 1

    if kh == 1 and kw == 1 and ph == 0 and pw == 0:
        # 1x1 conv: no im2col, just (strided) reshape.
        xs = x_nhwc if (sh, sw) == (1, 1) else x_nhwc[:, ::sh, ::sw, :]
        a = xs.reshape(n * ho * wo, cin)
    else:
        # TODO(synk): replace HBM im2col with in-kernel windowed DMA over the
        # (ki,kj) taps to avoid the kh*kw activation expansion for 3x3 convs.
        xp = jnp.pad(x_nhwc, ((0, 0), (ph, ph), (pw, pw), (0, 0)))
        cols = []
        for ki in range(kh):
            for kj in range(kw):
                cols.append(xp[:, ki * dh: ki * dh + (ho - 1) * sh + 1: sh,
                               kj * dw: kj * dw + (wo - 1) * sw + 1: sw, :])
        a = jnp.concatenate(cols, axis=-1).reshape(n * ho * wo, kh * kw * cin)

    bmat = jnp.transpose(w_oihw, (2, 3, 1, 0)).reshape(kh * kw * cin, cout)
    bmat = bmat.astype(jnp.bfloat16)

    id2 = None
    if identity is not None:
        id2 = identity.reshape(n * ho * wo, cout)

    out = matmul_bn(a, bmat, scale, bias, relu=relu, identity=id2)
    return out.reshape(n, ho, wo, cout)


# ----------------------------------------------------------------------------
# Deterministic synthetic parameters (shapes follow the mit_semseg resnet50
# deep-stem used by this module)
# ----------------------------------------------------------------------------

_EPS = 1e-5


def init_conv(key, cout, cin, kh, kw):
    fan_in = cin * kh * kw
    std = (2.0 / fan_in) ** 0.5
    return jax.random.normal(key, (cout, cin, kh, kw), jnp.float32) * std


def init_bn(key, c):
    k1, k2, k3, k4 = jax.random.split(key, 4)
    gamma = jax.random.uniform(k1, (c,), minval=0.35, maxval=0.7)
    beta = jax.random.normal(k2, (c,), jnp.float32) * 0.01
    mean = jax.random.normal(k3, (c,), jnp.float32) * 0.01
    var = jax.random.uniform(k4, (c,), minval=0.9, maxval=1.1)
    scale = gamma / jnp.sqrt(var + _EPS)
    bias = beta - mean * scale
    return scale.astype(jnp.float32), bias.astype(jnp.float32)


def bottleneck_params(key, inplanes, planes, has_downsample):
    ks = jax.random.split(key, 8)
    p = {
        "conv1": init_conv(ks[0], planes, inplanes, 1, 1),
        "bn1": init_bn(ks[1], planes),
        "conv2": init_conv(ks[2], planes, planes, 3, 3),
        "bn2": init_bn(ks[3], planes),
        "conv3": init_conv(ks[4], planes * 4, planes, 1, 1),
        "bn3": init_bn(ks[5], planes * 4),
    }
    if has_downsample:
        p["ds_conv"] = init_conv(ks[6], planes * 4, inplanes, 1, 1)
        p["ds_bn"] = init_bn(ks[7], planes * 4)
    return p


def make_params(key):
    keys = jax.random.split(key, 8)
    params = {
        "conv1": init_conv(keys[0], 64, 3, 3, 3), "bn1": init_bn(keys[1], 64),
        "conv2": init_conv(keys[2], 64, 64, 3, 3), "bn2": init_bn(keys[3], 64),
        "conv3": init_conv(keys[4], 128, 64, 3, 3),
        "bn3": init_bn(keys[5], 128),
    }
    layer_cfg = [(128, 64, 3), (256, 128, 4), (512, 256, 6), (1024, 512, 3)]
    lkeys = jax.random.split(keys[6], 4)
    for li, (inplanes, planes, nblocks) in enumerate(layer_cfg):
        bkeys = jax.random.split(lkeys[li], nblocks)
        blocks = []
        cur_in = inplanes
        for bi in range(nblocks):
            has_ds = (bi == 0)  # every first block changes channel count
            blocks.append(bottleneck_params(bkeys[bi], cur_in, planes, has_ds))
            cur_in = planes * 4
        params[f"layer{li + 1}"] = blocks
    return params


# ----------------------------------------------------------------------------
# Forward pass (semantics of Resnet(dilate_scale=8).forward)
# ----------------------------------------------------------------------------

def bottleneck_forward(x, p, conv2_stride, conv2_dil, conv2_pad, ds_stride):
    out = conv2d_bn_act(x, p["conv1"], *p["bn1"],
                        stride=(1, 1), padding=(0, 0), dilation=(1, 1),
                        relu=True)
    out = conv2d_bn_act(out, p["conv2"], *p["bn2"],
                        stride=(conv2_stride, conv2_stride),
                        padding=(conv2_pad, conv2_pad),
                        dilation=(conv2_dil, conv2_dil), relu=True)
    if "ds_conv" in p:
        identity = conv2d_bn_act(x, p["ds_conv"], *p["ds_bn"],
                                 stride=(ds_stride, ds_stride),
                                 padding=(0, 0), dilation=(1, 1), relu=False)
    else:
        identity = x
    # conv3 + BN + residual add + ReLU fused into one matmul epilogue.
    out = conv2d_bn_act(out, p["conv3"], *p["bn3"],
                        stride=(1, 1), padding=(0, 0), dilation=(1, 1),
                        relu=False, identity=identity)
    return out


# Per-layer conv2 (stride, dilation, padding) and downsample stride, after
# _nostride_dilate surgery with dilate_scale=8:
#   layer1: normal, stride 1
#   layer2: normal, stride 2 in first block
#   layer3: first block stride removed -> (1, dil 1, pad 1); rest dil 2
#   layer4: first block stride removed -> (1, dil 2, pad 2); rest dil 4
_LAYER_CFG = {
    "layer1": {"first": (1, 1, 1, 1), "rest": (1, 1, 1)},
    "layer2": {"first": (2, 1, 1, 2), "rest": (1, 1, 1)},
    "layer3": {"first": (1, 1, 1, 1), "rest": (1, 2, 2)},
    "layer4": {"first": (1, 2, 2, 1), "rest": (1, 4, 4)},
}


def run_layer(x, blocks, name):
    cfg = _LAYER_CFG[name]
    s, d, p, ds = cfg["first"]
    x = bottleneck_forward(x, blocks[0], s, d, p, ds)
    s, d, p = cfg["rest"]
    for blk in blocks[1:]:
        x = bottleneck_forward(x, blk, s, d, p, 1)
    return x


def resnet_forward(params, x_nchw):
    # NCHW -> NHWC, bf16 activations internally (f32 accumulation in the MXU)
    x = jnp.transpose(x_nchw, (0, 2, 3, 1)).astype(jnp.bfloat16)

    # deep stem: three 3x3 convs (first one stride 2) + maxpool
    x = conv2d_bn_act(x, params["conv1"], *params["bn1"],
                      stride=(2, 2), padding=(1, 1), dilation=(1, 1),
                      relu=True)
    x = conv2d_bn_act(x, params["conv2"], *params["bn2"],
                      stride=(1, 1), padding=(1, 1), dilation=(1, 1),
                      relu=True)
    x = conv2d_bn_act(x, params["conv3"], *params["bn3"],
                      stride=(1, 1), padding=(1, 1), dilation=(1, 1),
                      relu=True)
    x = maxpool_3x3_s2(x)

    x_1 = run_layer(x, params["layer1"], "layer1")
    x_2 = run_layer(x_1, params["layer2"], "layer2")
    x_aux = run_layer(x_2, params["layer3"], "layer3")
    x_4 = run_layer(x_aux, params["layer4"], "layer4")

    to_nchw = lambda t: jnp.transpose(t.astype(jnp.float32), (0, 3, 1, 2))
    return to_nchw(x_1), to_nchw(x_2), to_nchw(x_aux), to_nchw(x_4)


# ----------------------------------------------------------------------------
# Driver
# ----------------------------------------------------------------------------

if __name__ == "__main__":
    key = jax.random.PRNGKey(0)
    pkey, xkey = jax.random.split(key)

    params = make_params(pkey)
    # small spatial size; channels=3 as implied by conv1 of the module
    x = jax.random.normal(xkey, (2, 3, 32, 32), jnp.float32)

    x_1, x_2, x_aux, x_out = resnet_forward(params, x)
    jax.block_until_ready((x_1, x_2, x_aux, x_out))

    assert x_1.shape == (2, 256, 8, 8), x_1.shape
    assert x_2.shape == (2, 512, 4, 4), x_2.shape
    assert x_aux.shape == (2, 1024, 4, 4), x_aux.shape
    assert x_out.shape == (2, 2048, 4, 4), x_out.shape
    assert bool(jnp.isfinite(x_out).all())

    print("KERNEL_OK")
</pallas_src>

<mosaic_0001>
module attributes {stable_mosaic.version = 11 : i64} {
  func.func @_matmul_bn_kernel(%arg0: i32, %arg1: i32, %arg2: i32, %arg3: memref<256x27xbf16, #tpu.memory_space<vmem>>, %arg4: memref<27x64xbf16, #tpu.memory_space<vmem>>, %arg5: memref<1x64xf32, #tpu.memory_space<vmem>>, %arg6: memref<1x64xf32, #tpu.memory_space<vmem>>, %arg7: memref<256x64xbf16, #tpu.memory_space<vmem>>, %arg8: memref<256x64xf32, #tpu.memory_space<vmem>>) attributes {dimension_semantics = [#tpu.dimension_semantics<parallel>, #tpu.dimension_semantics<parallel>, #tpu.dimension_semantics<arbitrary>], iteration_bounds = array<i64: 2, 1, 1>, scalar_prefetch = 0 : i64, scratch_operands = 1 : i64, tpu.core_type = #tpu.core_type<tc>, window_params = [{transform_indices = @transform_0, window_bounds = array<i64: 256, 27>}, {transform_indices = @transform_1, window_bounds = array<i64: 27, 64>}, {transform_indices = @transform_2, window_bounds = array<i64: 1, 64>}, {transform_indices = @transform_3, window_bounds = array<i64: 1, 64>}, {transform_indices = @transform_4, window_bounds = array<i64: 256, 64>}]} {
    %c0_i32 = arith.constant 0 : i32
    %0 = arith.cmpi eq, %arg2, %c0_i32 : i32
    %1 = arith.extui %0 : i1 to i32
    %c0_i32_0 = arith.constant 0 : i32
    %2 = arith.cmpi ne, %1, %c0_i32_0 : i32
    scf.if %2 {
      %cst_10 = arith.constant 0.000000e+00 : f32
      %12 = vector.broadcast %cst_10 : f32 to vector<256x64xf32>
      %c0_11 = arith.constant 0 : index
      %c0_12 = arith.constant 0 : index
      %13 = vector.load %arg8[%c0_11, %c0_12] : memref<256x64xf32, #tpu.memory_space<vmem>>, vector<256x64xf32>
      tpu.vector_store %arg8[%c0_11, %c0_12], %12 {strides = array<i32>} : memref<256x64xf32, #tpu.memory_space<vmem>>, vector<256x64xf32>,
    } else {
    }
    %c0 = arith.constant 0 : index
    %c0_1 = arith.constant 0 : index
    %3 = vector.load %arg8[%c0, %c0_1] : memref<256x64xf32, #tpu.memory_space<vmem>>, vector<256x64xf32>
    %c0_2 = arith.constant 0 : index
    %c0_3 = arith.constant 0 : index
    %4 = vector.load %arg3[%c0_2, %c0_3] : memref<256x27xbf16, #tpu.memory_space<vmem>>, vector<256x27xbf16>
    %c0_4 = arith.constant 0 : index
    %c0_5 = arith.constant 0 : index
    %5 = vector.load %arg4[%c0_4, %c0_5] : memref<27x64xbf16, #tpu.memory_space<vmem>>, vector<27x64xbf16>
    %cst = arith.constant dense<0.000000e+00> : vector<256x64xf32>
    %6 = tpu.matmul %4, %5, %cst {dimension_numbers = #tpu.dot_dimension_numbers<[1], [0], [0], [1], [0, 0, 1, 1], [], []>} : vector<256x27xbf16>, vector<27x64xbf16>, vector<256x64xf32> -> vector<256x64xf32>
    %7 = arith.addf %3, %6 : vector<256x64xf32>
    %c0_6 = arith.constant 0 : index
    %c0_7 = arith.constant 0 : index
    %8 = vector.load %arg8[%c0_6, %c0_7] : memref<256x64xf32, #tpu.memory_space<vmem>>, vector<256x64xf32>
    tpu.vector_store %arg8[%c0_6, %c0_7], %7 {strides = array<i32>} : memref<256x64xf32, #tpu.memory_space<vmem>>, vector<256x64xf32>,
    %c0_i32_8 = arith.constant 0 : i32
    %9 = arith.cmpi eq, %arg2, %c0_i32_8 : i32
    %10 = arith.extui %9 : i1 to i32
    %c0_i32_9 = arith.constant 0 : i32
    %11 = arith.cmpi ne, %10, %c0_i32_9 : i32
    scf.if %11 {
      %c0_10 = arith.constant 0 : index
      %c0_11 = arith.constant 0 : index
      %12 = vector.load %arg8[%c0_10, %c0_11] : memref<256x64xf32, #tpu.memory_space<vmem>>, vector<256x64xf32>
      %c0_12 = arith.constant 0 : index
      %c0_13 = arith.constant 0 : index
      %13 = vector.load %arg5[%c0_12, %c0_13] : memref<1x64xf32, #tpu.memory_space<vmem>>, vector<1x64xf32>
      %14 = vector.broadcast %13 : vector<1x64xf32> to vector<256x64xf32>
      %15 = arith.mulf %12, %14 : vector<256x64xf32>
      %c0_14 = arith.constant 0 : index
      %c0_15 = arith.constant 0 : index
      %16 = vector.load %arg6[%c0_14, %c0_15] : memref<1x64xf32, #tpu.memory_space<vmem>>, vector<1x64xf32>
      %17 = vector.broadcast %16 : vector<1x64xf32> to vector<256x64xf32>
      %18 = arith.addf %15, %17 : vector<256x64xf32>
      %cst_16 = arith.constant 0.000000e+00 : f32
      %19 = vector.broadcast %cst_16 : f32 to vector<256x64xf32>
      %20 = arith.maximumf %18, %19 : vector<256x64xf32>
      %21 = arith.truncf %20 : vector<256x64xf32> to vector<256x64xbf16>
      %c0_17 = arith.constant 0 : index
      %c0_18 = arith.constant 0 : index
      %22 = vector.load %arg7[%c0_17, %c0_18] : memref<256x64xbf16, #tpu.memory_space<vmem>>, vector<256x64xbf16>
      tpu.vector_store %arg7[%c0_17, %c0_18], %21 {strides = array<i32>} : memref<256x64xbf16, #tpu.memory_space<vmem>>, vector<256x64xbf16>,
    } else {
    }
    return
  }
  func.func @transform_0(%arg0: i32, %arg1: i32, %arg2: i32) -> (i32, i32) {
    %c0_i32 = arith.constant 0 : i32
    return %arg0, %arg2 : i32, i32
  }
  func.func @transform_1(%arg0: i32, %arg1: i32, %arg2: i32) -> (i32, i32) {
    %c0_i32 = arith.constant 0 : i32
    return %arg2, %arg1 : i32, i32
  }
  func.func @transform_2(%arg0: i32, %arg1: i32, %arg2: i32) -> (i32, i32) {
    %c0_i32 = arith.constant 0 : i32
    %c0_i32_0 = arith.constant 0 : i32
    return %c0_i32, %arg1 : i32, i32
  }
  func.func @transform_3(%arg0: i32, %arg1: i32, %arg2: i32) -> (i32, i32) {
    %c0_i32 = arith.constant 0 : i32
    %c0_i32_0 = arith.constant 0 : i32
    return %c0_i32, %arg1 : i32, i32
  }
  func.func @transform_4(%arg0: i32, %arg1: i32, %arg2: i32) -> (i32, i32) {
    %c0_i32 = arith.constant 0 : i32
    return %arg0, %arg1 : i32, i32
  }
}

</mosaic_0001>

<llo_original>
// kernel: tpu_custom_call.1
$region0: #{tpu_custom_call.1}
  #allocation0 [shape = 'u32[]', space=smem, size = 0x4, offset = 0x4, fixed_abs, tag = 'smem constant byte address 0x4 - core index']
  #allocation1 [shape = 'u32[144,128]{1,0:T(1,128)}', space=vmem, size = 0x12000, scoped, tag = 'internal scratch']
  #allocation2 [shape = 'f32[256,64]{1,0:T(8,128)}', space=vmem, size = 0x20000, scoped, tag = 'scratch operand']
  %s0 = inlined_call_operand.vmem [shape: bf16[512,27], index: 0, kind: input, shape index: {}]
  %s1 = inlined_call_operand.vmem [shape: bf16[27,64], index: 1, kind: input, shape index: {}]
  %s2 = inlined_call_operand.vmem [shape: f32[1,64], index: 2, kind: input, shape index: {}]
  %s3 = inlined_call_operand.vmem [shape: f32[1,64], index: 3, kind: input, shape index: {}]
  %s4 = inlined_call_operand.vmem [shape: bf16[512,64], index: 4, kind: output, shape index: {}]
  %s5 = sld [smem:[#allocation0]]
  $region57: #{tpu_custom_call.1} parent=0
    _
  %s7 = ssub.s32 1, %s5
  %s8 = scalar_select 0, %s7, %s5
  loop: start=0, step=1, limit=4
  $region2: #{tpu_custom_call.1} parent=0 // loop_pre_header
    _
  $region3: #{tpu_custom_call.1} parent=0 // loop_header
    %s10 = sphi 0, %s14
    %p11 = scmp.ge.s32.totalorder %s10, 4
    %s17 = sphi 0, %s36
    %s18 = sphi 0, %s32
    %s19 = sphi 0, %s28
    %s20 = sphi 0, %s17
    %s21 = sphi 0, %s18
    %s22 = sphi 0, %s19
    %s23 = sphi 0, %s20
    %s24 = sphi 0, %s21
    %s25 = sphi 0, %s22
    %s41 = sphi 0, %s43
    %s44 = sphi 0, %s41
    %s45 = sphi 0, %s44
    %s61 = sphi 0, %s45
    %s69 = sphi 0, %s71
    %s72 = sphi 0, %s69
    %s73 = sphi 0, %s72
    %s89 = sphi 0, %s73
    %s95 = sphi 0, %s97
    %s98 = sphi 0, %s95
    %s99 = sphi 0, %s98
    %s115 = sphi 0, %s99
    %s121 = sphi 0, %s123
    %s124 = sphi 0, %s121
    %s125 = sphi 0, %s124
    %s141 = sphi 0, %s125
    %s149 = sphi 0, %s151
    %s152 = sphi 0, %s149
    %s153 = sphi 0, %s152
    %s169 = sphi 0, %s153
  $region4: #{tpu_custom_call.1} parent=0 // loop_header_branch
    %13 = sbr.rel (%p11) target = $region8
  $region5: #{tpu_custom_call.1} parent=0 // loop_body
    %s15 = ssub.s32 %s10, 1
    %s16 = ssub.s32 %s10, 2
    %s26 = sadd.s32 1, %s19
    %p27 = scmp.ge.s32.totalorder %s26, 1
    %s28 = scalar_select %p27, 0, %s26
    %s29 = sadd.s32 1, %s18
    %s30 = scalar_select %p27, %s29, %s18
    %p31 = scmp.ge.s32.totalorder %s30, 1
    %s32 = scalar_select %p31, 0, %s30
    %s33 = sadd.s32 1, %s17
    %s34 = scalar_select %p31, %s33, %s17
    %p35 = scmp.ge.s32.totalorder %s34, 2
    %s36 = scalar_select %p35, 0, %s34
    %s37 = ssub.s32 %s17, %s36
    %s38 = ssub.s32 %s19, %s28
    %s39 = sor.u32 %s37, %s38
    %p40 = scmp.eq.s32.totalorder %s39, 0
    %s42 = sadd.s32 %s41, 1
    %s43 = scalar_select %p40, %s41, %s42
    %p46 = pneg %p40
    %p47 = scmp.eq.s32.totalorder %s10, 1
    %p48 = por %p46, %p47
    %p49 = scmp.ne.s32.totalorder %s41, %s44
    %p50 = scmp.eq.s32.totalorder %s10, 0
    %p51 = por %p49, %p50
    %p52 = scmp.ne.s32.totalorder %s41, %s44
    %p53 = scmp.eq.s32.totalorder %s15, 1
    %p54 = por %p52, %p53
    %p55 = scmp.ne.s32.totalorder %s44, %s45
    %p56 = scmp.eq.s32.totalorder %s15, 0
    %p57 = por %p55, %p56
    %p58 = scmp.ne.s32.totalorder %s44, %s45
    %p59 = scmp.eq.s32.totalorder %s16, 1
    %p60 = por %p58, %p59
    %p62 = scmp.ne.s32.totalorder %s45, %s61
    %p63 = scmp.eq.s32.totalorder %s16, 0
    %p64 = por %p62, %p63
    %s65 = ssub.s32 %s19, %s28
    %s66 = ssub.s32 %s18, %s32
    %s67 = sor.u32 %s65, %s66
    %p68 = scmp.eq.s32.totalorder %s67, 0
    %s70 = sadd.s32 %s69, 1
    %s71 = scalar_select %p68, %s69, %s70
    %p74 = pneg %p68
    %p75 = scmp.eq.s32.totalorder %s10, 1
    %p76 = por %p74, %p75
    %p77 = scmp.ne.s32.totalorder %s69, %s72
    %p78 = scmp.eq.s32.totalorder %s10, 0
    %p79 = por %p77, %p78
    %p80 = scmp.ne.s32.totalorder %s69, %s72
    %p81 = scmp.eq.s32.totalorder %s15, 1
    %p82 = por %p80, %p81
    %p83 = scmp.ne.s32.totalorder %s72, %s73
    %p84 = scmp.eq.s32.totalorder %s15, 0
    %p85 = por %p83, %p84
    %p86 = scmp.ne.s32.totalorder %s72, %s73
    %p87 = scmp.eq.s32.totalorder %s16, 1
    %p88 = por %p86, %p87
    %p90 = scmp.ne.s32.totalorder %s73, %s89
    %p91 = scmp.eq.s32.totalorder %s16, 0
    %p92 = por %p90, %p91
    %s93 = ssub.s32 %s18, %s32
    %p94 = scmp.eq.s32.totalorder %s93, 0
    %s96 = sadd.s32 %s95, 1
    %s97 = scalar_select %p94, %s95, %s96
    %p100 = pneg %p94
    %p101 = scmp.eq.s32.totalorder %s10, 1
    %p102 = por %p100, %p101
    %p103 = scmp.ne.s32.totalorder %s95, %s98
    %p104 = scmp.eq.s32.totalorder %s10, 0
    %p105 = por %p103, %p104
    %p106 = scmp.ne.s32.totalorder %s95, %s98
    %p107 = scmp.eq.s32.totalorder %s15, 1
    %p108 = por %p106, %p107
    %p109 = scmp.ne.s32.totalorder %s98, %s99
    %p110 = scmp.eq.s32.totalorder %s15, 0
    %p111 = por %p109, %p110
    %p112 = scmp.ne.s32.totalorder %s98, %s99
    %p113 = scmp.eq.s32.totalorder %s16, 1
    %p114 = por %p112, %p113
    %p116 = scmp.ne.s32.totalorder %s99, %s115
    %p117 = scmp.eq.s32.totalorder %s16, 0
    %p118 = por %p116, %p117
    %s119 = ssub.s32 %s18, %s32
    %p120 = scmp.eq.s32.totalorder %s119, 0
    %s122 = sadd.s32 %s121, 1
    %s123 = scalar_select %p120, %s121, %s122
    %p126 = pneg %p120
    %p127 = scmp.eq.s32.totalorder %s10, 1
    %p128 = por %p126, %p127
    %p129 = scmp.ne.s32.totalorder %s121, %s124
    %p130 = scmp.eq.s32.totalorder %s10, 0
    %p131 = por %p129, %p130
    %p132 = scmp.ne.s32.totalorder %s121, %s124
    %p133 = scmp.eq.s32.totalorder %s15, 1
    %p134 = por %p132, %p133
    %p135 = scmp.ne.s32.totalorder %s124, %s125
    %p136 = scmp.eq.s32.totalorder %s15, 0
    %p137 = por %p135, %p136
    %p138 = scmp.ne.s32.totalorder %s124, %s125
    %p139 = scmp.eq.s32.totalorder %s16, 1
    %p140 = por %p138, %p139
    %p142 = scmp.ne.s32.totalorder %s125, %s141
    %p143 = scmp.eq.s32.totalorder %s16, 0
    %p144 = por %p142, %p143
    %s145 = ssub.s32 %s17, %s36
    %s146 = ssub.s32 %s18, %s32
    %s147 = sor.u32 %s145, %s146
    %p148 = scmp.eq.s32.totalorder %s147, 0
    %s150 = sadd.s32 %s149, 1
    %s151 = scalar_select %p148, %s149, %s150
    %p154 = pneg %p148
    %p155 = scmp.eq.s32.totalorder %s10, 1
    %p156 = por %p154, %p155
    %p157 = scmp.ne.s32.totalorder %s149, %s152
    %p158 = scmp.eq.s32.totalorder %s10, 0
    %p159 = por %p157, %p158
    %p160 = scmp.ne.s32.totalorder %s149, %s152
    %p161 = scmp.eq.s32.totalorder %s15, 1
    %p162 = por %p160, %p161
    %p163 = scmp.ne.s32.totalorder %s152, %s153
    %p164 = scmp.eq.s32.totalorder %s15, 0
    %p165 = por %p163, %p164
    %p166 = scmp.ne.s32.totalorder %s152, %s153
    %p167 = scmp.eq.s32.totalorder %s16, 1
    %p168 = por %p166, %p167
    %p170 = scmp.ne.s32.totalorder %s153, %s169
    %p171 = scmp.eq.s32.totalorder %s16, 0
    %p172 = por %p170, %p171
    %p173 = scmp.le.s32.totalorder 1, %s10
    %p174 = scmp.lt.s32.totalorder %s10, 3
    %p175 = pnand %p173, %p174
    %p176 = pneg %p175
    // Predicated region
    $region9: #{tpu_custom_call.1} parent=5 // pred_check
      _
    $region10: #{tpu_custom_call.1} parent=5 // pred_check_branch
      %178 = sbr.rel (%p175) target = $region12
    $region11: #{tpu_custom_call.1} parent=5 // pred_region
      %s179 = ssub.s32 %s10, 1
      // Predicated region
      $region13: #{tpu_custom_call.1} parent=11 // pred_check
        %p180 = pneg %p85
      $region14: #{tpu_custom_call.1} parent=11 // pred_check_branch
        %182 = sbr.rel (%p180) target = $region16
      $region15: #{tpu_custom_call.1} parent=11 // pred_region
        %s183 = smul.u32 4, %s22
        %p184 = scmp.lt.s32.totalorder %s183, 3
        %s185 = scalar_select %p184, %s183, 3
        %p186 = scmp.lt.s32.totalorder %s21, 0
        %s187 = scalar_select %p186, %s21, 0
        %s188 = sadd.s32 %s187, %s185
        %s189 = smul.addr %s188, 4
        %s190 = scalar_lea.vmem %s1, %s189
        %s191 = smul.u32 4, %s22
      $region16: #{tpu_custom_call.1} parent=11 // pred_fallthru
        _
      // Predicated region
      $region17: #{tpu_custom_call.1} parent=11 // pred_check
        %p192 = pneg %p111
      $region18: #{tpu_custom_call.1} parent=11 // pred_check_branch
        %194 = sbr.rel (%p192) target = $region20
      $region19: #{tpu_custom_call.1} parent=11 // pred_region
        %p195 = scmp.lt.s32.totalorder %s21, 0
        %s196 = scalar_select %p195, %s21, 0
        %s197 = scalar_lea.vmem %s2, %s196
      $region20: #{tpu_custom_call.1} parent=11 // pred_fallthru
        _
      // Predicated region
      $region21: #{tpu_custom_call.1} parent=11 // pred_check
        %p198 = pneg %p137
      $region22: #{tpu_custom_call.1} parent=11 // pred_check_branch
        %200 = sbr.rel (%p198) target = $region24
      $region23: #{tpu_custom_call.1} parent=11 // pred_region
        %p201 = scmp.lt.s32.totalorder %s21, 0
        %s202 = scalar_select %p201, %s21, 0
        %s203 = scalar_lea.vmem %s3, %s202
      $region24: #{tpu_custom_call.1} parent=11 // pred_fallthru
        _
    $region12: #{tpu_custom_call.1} parent=5 // pred_fallthru
      _
    %p204 = scmp.lt.s32.totalorder %s10, 2
    // Predicated region
    $region25: #{tpu_custom_call.1} parent=5 // pred_check
      %p205 = pneg %p204
    $region26: #{tpu_custom_call.1} parent=5 // pred_check_branch
      %207 = sbr.rel (%p205) target = $region28
    $region27: #{tpu_custom_call.1} parent=5 // pred_region
      // Predicated region
      $region29: #{tpu_custom_call.1} parent=27 // pred_check
        %p208 = pneg %p51
      $region30: #{tpu_custom_call.1} parent=27 // pred_check_branch
        %210 = sbr.rel (%p208) target = $region32
      $region31: #{tpu_custom_call.1} parent=27 // pred_region
        %s211 = smul.u32 32, %s17
        %p212 = scmp.lt.s32.totalorder %s211, 63
        %s213 = scalar_select %p212, %s211, 63
        %p214 = scmp.lt.s32.totalorder %s19, 0
        %s215 = scalar_select %p214, %s19, 0
        %s216 = sadd.s32 %s215, %s213
        %s217 = smul.addr %s216, 4
        %s218 = scalar_lea.vmem %s0, %s217
        %s219 = smul.u32 32, %s17
      $region32: #{tpu_custom_call.1} parent=27 // pred_fallthru
        _
    $region28: #{tpu_custom_call.1} parent=5 // pred_fallthru
      _
    %p220 = scmp.le.s32.totalorder 1, %s10
    %p221 = scmp.lt.s32.totalorder %s10, 3
    %p222 = pnand %p220, %p221
    %p223 = pneg %p222
    // Predicated region
    $region33: #{tpu_custom_call.1} parent=5 // pred_check
      _
    $region34: #{tpu_custom_call.1} parent=5 // pred_check_branch
      %225 = sbr.rel (%p222) target = $region36
    $region35: #{tpu_custom_call.1} parent=5 // pred_region
      %s226 = ssub.s32 %s10, 1
      %s227 = smul.u32 32, %s20
      %p228 = scmp.lt.s32.totalorder %s227, 63
      %s229 = scalar_select %p228, %s227, 63
      %p230 = scmp.lt.s32.totalorder %s22, 0
      %s231 = scalar_select %p230, %s22, 0
      %s232 = sadd.s32 %s231, %s229
      %s233 = smul.addr %s232, 4
      %s234 = scalar_lea.vmem %s0, %s233
      %p235 = pneg %p57
      %p236 = pneg %p54
      %s237 = smul.u32 4, %s22
      %p238 = scmp.lt.s32.totalorder %s237, 3
      %s239 = scalar_select %p238, %s237, 3
      %p240 = scmp.lt.s32.totalorder %s21, 0
      %s241 = scalar_select %p240, %s21, 0
      %s242 = sadd.s32 %s241, %s239
      %s243 = smul.addr %s242, 4
      %s244 = scalar_lea.vmem %s1, %s243
      %p245 = pneg %p85
      %p246 = pneg %p82
      %p247 = scmp.lt.s32.totalorder %s21, 0
      %s248 = scalar_select %p247, %s21, 0
      %s249 = scalar_lea.vmem %s2, %s248
      %p250 = pneg %p111
      %p251 = pneg %p108
      %p252 = scmp.lt.s32.totalorder %s21, 0
      %s253 = scalar_select %p252, %s21, 0
      %s254 = scalar_lea.vmem %s3, %s253
      %p255 = pneg %p137
      %p256 = pneg %p134
      %p257 = pneg %p165
      %p258 = pneg %p162
      %s259 = smul.u32 32, %s20
      %p260 = scmp.lt.s32.totalorder %s259, 63
      %s261 = scalar_select %p260, %s259, 63
      %p262 = scmp.lt.s32.totalorder %s21, 0
      %s263 = scalar_select %p262, %s21, 0
      %s264 = sadd.s32 %s263, %s261
      %s265 = smul.addr %s264, 4
      %s266 = scalar_lea.vmem %s4, %s265
      %s267 = smul.u32 32, %s20
      %p268 = scmp.lt.s32.totalorder %s267, 63
      %s269 = scalar_select %p268, %s267, 63
      %p270 = scmp.lt.s32.totalorder %s22, 0
      %s271 = scalar_select %p270, %s22, 0
      %s272 = sadd.s32 %s271, %s269
      %s273 = smul.addr %s272, 4
      %s274 = scalar_lea.vmem %s0, %s273
      %s275 = smul.u32 32, %s20
      %s276 = smul.u32 4, %s22
      %p277 = scmp.lt.s32.totalorder %s276, 3
      %s278 = scalar_select %p277, %s276, 3
      %p279 = scmp.lt.s32.totalorder %s21, 0
      %s280 = scalar_select %p279, %s21, 0
      %s281 = sadd.s32 %s280, %s278
      %s282 = smul.addr %s281, 4
      %s283 = scalar_lea.vmem %s1, %s282
      %s284 = smul.u32 4, %s22
      %p285 = scmp.lt.s32.totalorder %s21, 0
      %s286 = scalar_select %p285, %s21, 0
      %s287 = scalar_lea.vmem %s2, %s286
      %p288 = scmp.lt.s32.totalorder %s21, 0
      %s289 = scalar_select %p288, %s21, 0
      %s290 = scalar_lea.vmem %s3, %s289
      %s291 = smul.u32 32, %s20
      %p292 = scmp.lt.s32.totalorder %s291, 63
      %s293 = scalar_select %p292, %s291, 63
      %p294 = scmp.lt.s32.totalorder %s21, 0
      %s295 = scalar_select %p294, %s21, 0
      %s296 = sadd.s32 %s295, %s293
      %s297 = smul.addr %s296, 4
      %s298 = scalar_lea.vmem %s4, %s297
      %s299 = smul.u32 32, %s20
      %p301 = scmp.eq.s32.totalorder %s22, 0
      // Predicated region
      $region37: #{tpu_custom_call.1} parent=35 // pred_check
        %p302 = pneg %p301
      $region38: #{tpu_custom_call.1} parent=35 // pred_check_branch
        %304 = sbr.rel (%p302) target = $region40
      $region39: #{tpu_custom_call.1} parent=35 // pred_region
        %vm305 = vcmask 523264
        %306 = vst.msk [vmem:[#allocation2] sm:$0xff] %vm305, 0.0
        %307 = vst.msk [vmem:[#allocation2 + $0x8] sm:$0xff] %vm305, 0.0
        %308 = vst.msk [vmem:[#allocation2 + $0x10] sm:$0xff] %vm305, 0.0
        %309 = vst.msk [vmem:[#allocation2 + $0x18] sm:$0xff] %vm305, 0.0
        %310 = vst.msk [vmem:[#allocation2 + $0x20] sm:$0xff] %vm305, 0.0
        %311 = vst.msk [vmem:[#allocation2 + $0x28] sm:$0xff] %vm305, 0.0
        %312 = vst.msk [vmem:[#allocation2 + $0x30] sm:$0xff] %vm305, 0.0
        %313 = vst.msk [vmem:[#allocation2 + $0x38] sm:$0xff] %vm305, 0.0
        %314 = vst.msk [vmem:[#allocation2 + $0x40] sm:$0xff] %vm305, 0.0
        %315 = vst.msk [vmem:[#allocation2 + $0x48] sm:$0xff] %vm305, 0.0
        %316 = vst.msk [vmem:[#allocation2 + $0x50] sm:$0xff] %vm305, 0.0
        %317 = vst.msk [vmem:[#allocation2 + $0x58] sm:$0xff] %vm305, 0.0
        %318 = vst.msk [vmem:[#allocation2 + $0x60] sm:$0xff] %vm305, 0.0
        %319 = vst.msk [vmem:[#allocation2 + $0x68] sm:$0xff] %vm305, 0.0
        %320 = vst.msk [vmem:[#allocation2 + $0x70] sm:$0xff] %vm305, 0.0
        %321 = vst.msk [vmem:[#allocation2 + $0x78] sm:$0xff] %vm305, 0.0
        %322 = vst.msk [vmem:[#allocation2 + $0x80] sm:$0xff] %vm305, 0.0
        %323 = vst.msk [vmem:[#allocation2 + $0x88] sm:$0xff] %vm305, 0.0
        %324 = vst.msk [vmem:[#allocation2 + $0x90] sm:$0xff] %vm305, 0.0
        %325 = vst.msk [vmem:[#allocation2 + $0x98] sm:$0xff] %vm305, 0.0
        %326 = vst.msk [vmem:[#allocation2 + $0xa0] sm:$0xff] %vm305, 0.0
        %327 = vst.msk [vmem:[#allocation2 + $0xa8] sm:$0xff] %vm305, 0.0
        %328 = vst.msk [vmem:[#allocation2 + $0xb0] sm:$0xff] %vm305, 0.0
        %329 = vst.msk [vmem:[#allocation2 + $0xb8] sm:$0xff] %vm305, 0.0
        %330 = vst.msk [vmem:[#allocation2 + $0xc0] sm:$0xff] %vm305, 0.0
        %331 = vst.msk [vmem:[#allocation2 + $0xc8] sm:$0xff] %vm305, 0.0
        %332 = vst.msk [vmem:[#allocation2 + $0xd0] sm:$0xff] %vm305, 0.0
        %333 = vst.msk [vmem:[#allocation2 + $0xd8] sm:$0xff] %vm305, 0.0
        %334 = vst.msk [vmem:[#allocation2 + $0xe0] sm:$0xff] %vm305, 0.0
        %335 = vst.msk [vmem:[#allocation2 + $0xe8] sm:$0xff] %vm305, 0.0
        %336 = vst.msk [vmem:[#allocation2 + $0xf0] sm:$0xff] %vm305, 0.0
        %337 = vst.msk [vmem:[#allocation2 + $0xf8] sm:$0xff] %vm305, 0.0
      $region40: #{tpu_custom_call.1} parent=35 // pred_fallthru
        _
      %v338 = vld [vmem:[#allocation2] sm:$0xff]
      %v339 = vld [vmem:[#allocation2 + $0x8] sm:$0xff]
      %v340 = vld [vmem:[#allocation2 + $0x10] sm:$0xff]
      %v341 = vld [vmem:[#allocation2 + $0x18] sm:$0xff]
      %v342 = vld [vmem:[#allocation2 + $0x20] sm:$0xff]
      %v343 = vld [vmem:[#allocation2 + $0x28] sm:$0xff]
      %v344 = vld [vmem:[#allocation2 + $0x30] sm:$0xff]
      %v345 = vld [vmem:[#allocation2 + $0x38] sm:$0xff]
      %v346 = vld [vmem:[#allocation2 + $0x40] sm:$0xff]
      %v347 = vld [vmem:[#allocation2 + $0x48] sm:$0xff]
      %v348 = vld [vmem:[#allocation2 + $0x50] sm:$0xff]
      %v349 = vld [vmem:[#allocation2 + $0x58] sm:$0xff]
      %v350 = vld [vmem:[#allocation2 + $0x60] sm:$0xff]
      %v351 = vld [vmem:[#allocation2 + $0x68] sm:$0xff]
      %v352 = vld [vmem:[#allocation2 + $0x70] sm:$0xff]
      %v353 = vld [vmem:[#allocation2 + $0x78] sm:$0xff]
      %v354 = vld [vmem:[#allocation2 + $0x80] sm:$0xff]
      %v355 = vld [vmem:[#allocation2 + $0x88] sm:$0xff]
      %v356 = vld [vmem:[#allocation2 + $0x90] sm:$0xff]
      %v357 = vld [vmem:[#allocation2 + $0x98] sm:$0xff]
      %v358 = vld [vmem:[#allocation2 + $0xa0] sm:$0xff]
      %v359 = vld [vmem:[#allocation2 + $0xa8] sm:$0xff]
      %v360 = vld [vmem:[#allocation2 + $0xb0] sm:$0xff]
      %v361 = vld [vmem:[#allocation2 + $0xb8] sm:$0xff]
      %v362 = vld [vmem:[#allocation2 + $0xc0] sm:$0xff]
      %v363 = vld [vmem:[#allocation2 + $0xc8] sm:$0xff]
      %v364 = vld [vmem:[#allocation2 + $0xd0] sm:$0xff]
      %v365 = vld [vmem:[#allocation2 + $0xd8] sm:$0xff]
      %v366 = vld [vmem:[#allocation2 + $0xe0] sm:$0xff]
      %v367 = vld [vmem:[#allocation2 + $0xe8] sm:$0xff]
      %v368 = vld [vmem:[#allocation2 + $0xf0] sm:$0xff]
      %v369 = vld [vmem:[#allocation2 + $0xf8] sm:$0xff]
      %v370 = vld [vmem:[%s274] sm:$0xf]
      %v371 = vld [vmem:[%s274 + $0x4] sm:$0xf]
      %v372 = vld [vmem:[%s274 + $0x8] sm:$0xf]
      %v373 = vld [vmem:[%s274 + $0xc] sm:$0xf]
      %v374 = vld [vmem:[%s274 + $0x10] sm:$0xf]
      %v375 = vld [vmem:[%s274 + $0x14] sm:$0xf]
      %v376 = vld [vmem:[%s274 + $0x18] sm:$0xf]
      %v377 = vld [vmem:[%s274 + $0x1c] sm:$0xf]
      %v378 = vld [vmem:[%s274 + $0x20] sm:$0xf]
      %v379 = vld [vmem:[%s274 + $0x24] sm:$0xf]
      %v380 = vld [vmem:[%s274 + $0x28] sm:$0xf]
      %v381 = vld [vmem:[%s274 + $0x2c] sm:$0xf]
      %v382 = vld [vmem:[%s274 + $0x30] sm:$0xf]
      %v383 = vld [vmem:[%s274 + $0x34] sm:$0xf]
      %v384 = vld [vmem:[%s274 + $0x38] sm:$0xf]
      %v385 = vld [vmem:[%s274 + $0x3c] sm:$0xf]
      %v386 = vld [vmem:[%s274 + $0x40] sm:$0xf]
      %v387 = vld [vmem:[%s274 + $0x44] sm:$0xf]
      %v388 = vld [vmem:[%s274 + $0x48] sm:$0xf]
      %v389 = vld [vmem:[%s274 + $0x4c] sm:$0xf]
      %v390 = vld [vmem:[%s274 + $0x50] sm:$0xf]
      %v391 = vld [vmem:[%s274 + $0x54] sm:$0xf]
      %v392 = vld [vmem:[%s274 + $0x58] sm:$0xf]
      %v393 = vld [vmem:[%s274 + $0x5c] sm:$0xf]
      %v394 = vld [vmem:[%s274 + $0x60] sm:$0xf]
      %v395 = vld [vmem:[%s274 + $0x64] sm:$0xf]
      %v396 = vld [vmem:[%s274 + $0x68] sm:$0xf]
      %v397 = vld [vmem:[%s274 + $0x6c] sm:$0xf]
      %v398 = vld [vmem:[%s274 + $0x70] sm:$0xf]
      %v399 = vld [vmem:[%s274 + $0x74] sm:$0xf]
      %v400 = vld [vmem:[%s274 + $0x78] sm:$0xf]
      %v401 = vld [vmem:[%s274 + $0x7c] sm:$0xf]
      %v402 = vld [vmem:[%s283] sm:$0xf]
      %v403 = vld [vmem:[%s283 + $0x4] sm:$0xf]
      %v404 = vld [vmem:[%s283 + $0x8] sm:$0xf]
      %v405 = vld [vmem:[%s283 + $0xc] sm:$0x3]
      %v438 = vunpack.c.l.b16 %v370
      %v439 = vunpack.c.l.b16 %v371
      %v440 = vunpack.c.l.b16 %v372
      %v441 = vunpack.c.l.b16 %v373
      %v442 = vunpack.c.l.b16 %v374
      %v443 = vunpack.c.l.b16 %v375
      %v444 = vunpack.c.l.b16 %v376
      %v445 = vunpack.c.l.b16 %v377
      %v446 = vunpack.c.l.b16 %v378
      %v447 = vunpack.c.l.b16 %v379
      %v448 = vunpack.c.l.b16 %v380
      %v449 = vunpack.c.l.b16 %v381
      %v450 = vunpack.c.l.b16 %v382
      %v451 = vunpack.c.l.b16 %v383
      %v452 = vunpack.c.l.b16 %v384
      %v453 = vunpack.c.l.b16 %v385
      %v454 = vunpack.c.l.b16 %v386
      %v455 = vunpack.c.l.b16 %v387
      %v456 = vunpack.c.l.b16 %v388
      %v457 = vunpack.c.l.b16 %v389
      %v458 = vunpack.c.l.b16 %v390
      %v459 = vunpack.c.l.b16 %v391
      %v460 = vunpack.c.l.b16 %v392
      %v461 = vunpack.c.l.b16 %v393
      %v462 = vunpack.c.l.b16 %v394
      %v463 = vunpack.c.l.b16 %v395
      %v464 = vunpack.c.l.b16 %v396
      %v465 = vunpack.c.l.b16 %v397
      %v466 = vunpack.c.l.b16 %v398
      %v467 = vunpack.c.l.b16 %v399
      %v468 = vunpack.c.l.b16 %v400
      %v469 = vunpack.c.l.b16 %v401
      %v470 = vpack.c.b16 %v439, %v438
      %v471 = vpack.c.b16 %v441, %v440
      %v472 = vpack.c.b16 %v443, %v442
      %v473 = vpack.c.b16 %v445, %v444
      %v474 = vpack.c.b16 %v447, %v446
      %v475 = vpack.c.b16 %v449, %v448
      %v476 = vpack.c.b16 %v451, %v450
      %v477 = vpack.c.b16 %v453, %v452
      %v478 = vpack.c.b16 %v455, %v454
      %v479 = vpack.c.b16 %v457, %v456
      %v480 = vpack.c.b16 %v459, %v458
      %v481 = vpack.c.b16 %v461, %v460
      %v482 = vpack.c.b16 %v463, %v462
      %v483 = vpack.c.b16 %v465, %v464
      %v484 = vpack.c.b16 %v467, %v466
      %v485 = vpack.c.b16 %v469, %v468
      %v490 = vunpack.c.l.b16 %v402
      %v491 = vunpack.c.l.b16 %v403
      %v492 = vunpack.c.l.b16 %v404
      %v493 = vunpack.c.l.b16 %v405
      %v494 = vpack.c.b16 %v491, %v490
      %v495 = vpack.c.b16 %v493, %v492
      %vm497 = vcmask 220160
      %v499 = vsel %vm497, %v470, 0
      %v502 = vsel %vm497, %v471, 0
      %v505 = vsel %vm497, %v472, 0
      %v508 = vsel %vm497, %v473, 0
      %v511 = vsel %vm497, %v474, 0
      %v514 = vsel %vm497, %v475, 0
      %v517 = vsel %vm497, %v476, 0
      %v520 = vsel %vm497, %v477, 0
      %v523 = vsel %vm497, %v478, 0
      %v526 = vsel %vm497, %v479, 0
      %v529 = vsel %vm497, %v480, 0
      %v532 = vsel %vm497, %v481, 0
      %v535 = vsel %vm497, %v482, 0
      %v538 = vsel %vm497, %v483, 0
      %v541 = vsel %vm497, %v484, 0
      %v544 = vsel %vm497, %v485, 0
      %vm546 = vcmask 1044480
      %vm547 = vcmask 1045504
      %v548 = vsel %vm546, 4294967295, 65535
      %v549 = vsel %vm547, %v548, 0
      %v551 = vand.u32 %v495, %v549
      %553 = vmatprep.subr.bf16.mxu0 0
      %554 = vmatpush1.bf16.msra.mxu0 %v494
      %555 = vmatprep.subr.bf16.mxu0 0
      %556 = vmatpush1.bf16.msra.mxu0 %v551
      %557 = vmatprep.subr.bf16.mxu0 0
      %558 = vmatpush1.bf16.msra.mxu0 0
      %559 = vmatprep.subr.bf16.mxu0 0
      %560 = vmatpush1.bf16.msra.mxu0 0
      %561 = vmatprep.subr.bf16.mxu0 0
      %562 = vmatpush1.bf16.msra.mxu0 0
      %563 = vmatprep.subr.bf16.mxu0 0
      %564 = vmatpush1.bf16.msra.mxu0 0
      %565 = vmatprep.subr.bf16.mxu0 0
      %566 = vmatpush1.bf16.msra.mxu0 0
      %567 = vmatprep.subr.bf16.mxu0 0
      %568 = vmatpush1.bf16.msra.mxu0 0
      %569 = vmatprep.subr.bf16.mxu0 0
      %570 = vmatpush1.bf16.msra.mxu0 0
      %571 = vmatprep.subr.bf16.mxu0 0
      %572 = vmatpush1.bf16.msra.mxu0 0
      %573 = vmatprep.subr.bf16.mxu0 0
      %574 = vmatpush1.bf16.msra.mxu0 0
      %575 = vmatprep.subr.bf16.mxu0 0
      %576 = vmatpush1.bf16.msra.mxu0 0
      %577 = vmatprep.subr.bf16.mxu0 0
      %578 = vmatpush1.bf16.msra.mxu0 0
      %579 = vmatprep.subr.bf16.mxu0 0
      %580 = vmatpush1.bf16.msra.mxu0 0
      %581 = vmatprep.subr.bf16.mxu0 0
      %582 = vmatpush1.bf16.msra.mxu0 0
      %583 = vmatprep.subr.bf16.mxu0 0
      %584 = vmatpush1.bf16.msra.mxu0 0
      %585 = vmatprep.mubr.bf16.mxu0 0
      %586 = vmatmul.mubr.bf16.gmra.mrb[0].mxu0 %v499
      %v587 = vpop.f32.mrb[0].mxu0
      %v588 = vadd.f32 0.0, %v587
      %v589 = vpop.f32.mrb[0].mxu0
      %v590 = vpop.f32.mrb[0].mxu0
      %v591 = vadd.f32 0.0, %v590
      %v592 = vpop.f32.mrb[0].mxu0
      %593 = vmatprep.mubr.bf16.mxu0 0
      %594 = vmatmul.mubr.bf16.gmra.mrb[0].mxu0 %v502
      %v595 = vpop.f32.mrb[0].mxu0
      %v596 = vadd.f32 0.0, %v595
      %v597 = vpop.f32.mrb[0].mxu0
      %v598 = vpop.f32.mrb[0].mxu0
      %v599 = vadd.f32 0.0, %v598
      %v600 = vpop.f32.mrb[0].mxu0
      %601 = vmatprep.mubr.bf16.mxu0 0
      %602 = vmatmul.mubr.bf16.gmra.mrb[0].mxu0 %v505
      %v603 = vpop.f32.mrb[0].mxu0
      %v604 = vadd.f32 0.0, %v603
      %v605 = vpop.f32.mrb[0].mxu0
      %v606 = vpop.f32.mrb[0].mxu0
      %v607 = vadd.f32 0.0, %v606
      %v608 = vpop.f32.mrb[0].mxu0
      %609 = vmatprep.mubr.bf16.mxu0 0
      %610 = vmatmul.mubr.bf16.gmra.mrb[0].mxu0 %v508
      %v611 = vpop.f32.mrb[0].mxu0
      %v612 = vadd.f32 0.0, %v611
      %v613 = vpop.f32.mrb[0].mxu0
      %v614 = vpop.f32.mrb[0].mxu0
      %v615 = vadd.f32 0.0, %v614
      %v616 = vpop.f32.mrb[0].mxu0
      %617 = vmatprep.mubr.bf16.mxu0 0
      %618 = vmatmul.mubr.bf16.gmra.mrb[0].mxu0 %v511
      %v619 = vpop.f32.mrb[0].mxu0
      %v620 = vadd.f32 0.0, %v619
      %v621 = vpop.f32.mrb[0].mxu0
      %v622 = vpop.f32.mrb[0].mxu0
      %v623 = vadd.f32 0.0, %v622
      %v624 = vpop.f32.mrb[0].mxu0
      %625 = vmatprep.mubr.bf16.mxu0 0
      %626 = vmatmul.mubr.bf16.gmra.mrb[0].mxu0 %v514
      %v627 = vpop.f32.mrb[0].mxu0
      %v628 = vadd.f32 0.0, %v627
      %v629 = vpop.f32.mrb[0].mxu0
      %v630 = vpop.f32.mrb[0].mxu0
      %v631 = vadd.f32 0.0, %v630
      %v632 = vpop.f32.mrb[0].mxu0
      %633 = vmatprep.mubr.bf16.mxu0 0
      %634 = vmatmul.mubr.bf16.gmra.mrb[0].mxu0 %v517
      %v635 = vpop.f32.mrb[0].mxu0
      %v636 = vadd.f32 0.0, %v635
      %v637 = vpop.f32.mrb[0].mxu0
      %v638 = vpop.f32.mrb[0].mxu0
      %v639 = vadd.f32 0.0, %v638
      %v640 = vpop.f32.mrb[0].mxu0
      %641 = vmatprep.mubr.bf16.mxu0 0
      %642 = vmatmul.mubr.bf16.gmra.mrb[0].mxu0 %v520
      %v643 = vpop.f32.mrb[0].mxu0
      %v644 = vadd.f32 0.0, %v643
      %v645 = vpop.f32.mrb[0].mxu0
      %v646 = vpop.f32.mrb[0].mxu0
      %v647 = vadd.f32 0.0, %v646
      %v648 = vpop.f32.mrb[0].mxu0
      %649 = vmatprep.mubr.bf16.mxu0 0
      %650 = vmatmul.mubr.bf16.gmra.mrb[0].mxu0 %v523
      %v651 = vpop.f32.mrb[0].mxu0
      %v652 = vadd.f32 0.0, %v651
      %v653 = vpop.f32.mrb[0].mxu0
      %v654 = vpop.f32.mrb[0].mxu0
      %v655 = vadd.f32 0.0, %v654
      %v656 = vpop.f32.mrb[0].mxu0
      %657 = vmatprep.mubr.bf16.mxu0 0
      %658 = vmatmul.mubr.bf16.gmra.mrb[0].mxu0 %v526
      %v659 = vpop.f32.mrb[0].mxu0
      %v660 = vadd.f32 0.0, %v659
      %v661 = vpop.f32.mrb[0].mxu0
      %v662 = vpop.f32.mrb[0].mxu0
      %v663 = vadd.f32 0.0, %v662
      %v664 = vpop.f32.mrb[0].mxu0
      %665 = vmatprep.mubr.bf16.mxu0 0
      %666 = vmatmul.mubr.bf16.gmra.mrb[0].mxu0 %v529
      %v667 = vpop.f32.mrb[0].mxu0
      %v668 = vadd.f32 0.0, %v667
      %v669 = vpop.f32.mrb[0].mxu0
      %v670 = vpop.f32.mrb[0].mxu0
      %v671 = vadd.f32 0.0, %v670
      %v672 = vpop.f32.mrb[0].mxu0
      %673 = vmatprep.mubr.bf16.mxu0 0
      %674 = vmatmul.mubr.bf16.gmra.mrb[0].mxu0 %v532
      %v675 = vpop.f32.mrb[0].mxu0
      %v676 = vadd.f32 0.0, %v675
      %v677 = vpop.f32.mrb[0].mxu0
      %v678 = vpop.f32.mrb[0].mxu0
      %v679 = vadd.f32 0.0, %v678
      %v680 = vpop.f32.mrb[0].mxu0
      %681 = vmatprep.mubr.bf16.mxu0 0
      %682 = vmatmul.mubr.bf16.gmra.mrb[0].mxu0 %v535
      %v683 = vpop.f32.mrb[0].mxu0
      %v684 = vadd.f32 0.0, %v683
      %v685 = vpop.f32.mrb[0].mxu0
      %v686 = vpop.f32.mrb[0].mxu0
      %v687 = vadd.f32 0.0, %v686
      %v688 = vpop.f32.mrb[0].mxu0
      %689 = vmatprep.mubr.bf16.mxu0 0
      %690 = vmatmul.mubr.bf16.gmra.mrb[0].mxu0 %v538
      %v691 = vpop.f32.mrb[0].mxu0
      %v692 = vadd.f32 0.0, %v691
      %v693 = vpop.f32.mrb[0].mxu0
      %v694 = vpop.f32.mrb[0].mxu0
      %v695 = vadd.f32 0.0, %v694
      %v696 = vpop.f32.mrb[0].mxu0
      %697 = vmatprep.mubr.bf16.mxu0 0
      %698 = vmatmul.mubr.bf16.gmra.mrb[0].mxu0 %v541
      %v699 = vpop.f32.mrb[0].mxu0
      %v700 = vadd.f32 0.0, %v699
      %v701 = vpop.f32.mrb[0].mxu0
      %v702 = vpop.f32.mrb[0].mxu0
      %v703 = vadd.f32 0.0, %v702
      %v704 = vpop.f32.mrb[0].mxu0
      %705 = vmatprep.mubr.bf16.mxu0 0
      %706 = vmatmul.mubr.bf16.gmra.mrb[0].mxu0 %v544
      %v707 = vpop.f32.mrb[0].mxu0
      %v708 = vadd.f32 0.0, %v707
      %v709 = vpop.f32.mrb[0].mxu0
      %v710 = vpop.f32.mrb[0].mxu0
      %v711 = vadd.f32 0.0, %v710
      %v712 = vpop.f32.mrb[0].mxu0
      %713 = vdwg.mxu0
      %v714 = vadd.f32 %v338, %v588
      %v715 = vadd.f32 %v339, %v591
      %v716 = vadd.f32 %v340, %v596
      %v717 = vadd.f32 %v341, %v599
      %v718 = vadd.f32 %v342, %v604
      %v719 = vadd.f32 %v343, %v607
      %v720 = vadd.f32 %v344, %v612
      %v721 = vadd.f32 %v345, %v615
      %v722 = vadd.f32 %v346, %v620
      %v723 = vadd.f32 %v347, %v623
      %v724 = vadd.f32 %v348, %v628
      %v725 = vadd.f32 %v349, %v631
      %v726 = vadd.f32 %v350, %v636
      %v727 = vadd.f32 %v351, %v639
      %v728 = vadd.f32 %v352, %v644
      %v729 = vadd.f32 %v353, %v647
      %v730 = vadd.f32 %v354, %v652
      %v731 = vadd.f32 %v355, %v655
      %v732 = vadd.f32 %v356, %v660
      %v733 = vadd.f32 %v357, %v663
      %v734 = vadd.f32 %v358, %v668
      %v735 = vadd.f32 %v359, %v671
      %v736 = vadd.f32 %v360, %v676
      %v737 = vadd.f32 %v361, %v679
      %v738 = vadd.f32 %v362, %v684
      %v739 = vadd.f32 %v363, %v687
      %v740 = vadd.f32 %v364, %v692
      %v741 = vadd.f32 %v365, %v695
      %v742 = vadd.f32 %v366, %v700
      %v743 = vadd.f32 %v367, %v703
      %v744 = vadd.f32 %v368, %v708
      %v745 = vadd.f32 %v369, %v711
      %vm746 = vcmask 523264
      %747 = vst.msk [vmem:[#allocation2] sm:$0xff] %vm746, %v714
      %748 = vst.msk [vmem:[#allocation2 + $0x8] sm:$0xff] %vm746, %v715
      %749 = vst.msk [vmem:[#allocation2 + $0x10] sm:$0xff] %vm746, %v716
      %750 = vst.msk [vmem:[#allocation2 + $0x18] sm:$0xff] %vm746, %v717
      %751 = vst.msk [vmem:[#allocation2 + $0x20] sm:$0xff] %vm746, %v718
      %752 = vst.msk [vmem:[#allocation2 + $0x28] sm:$0xff] %vm746, %v719
      %753 = vst.msk [vmem:[#allocation2 + $0x30] sm:$0xff] %vm746, %v720
      %754 = vst.msk [vmem:[#allocation2 + $0x38] sm:$0xff] %vm746, %v721
      %755 = vst.msk [vmem:[#allocation2 + $0x40] sm:$0xff] %vm746, %v722
      %756 = vst.msk [vmem:[#allocation2 + $0x48] sm:$0xff] %vm746, %v723
      %757 = vst.msk [vmem:[#allocation2 + $0x50] sm:$0xff] %vm746, %v724
      %758 = vst.msk [vmem:[#allocation2 + $0x58] sm:$0xff] %vm746, %v725
      %759 = vst.msk [vmem:[#allocation2 + $0x60] sm:$0xff] %vm746, %v726
      %760 = vst.msk [vmem:[#allocation2 + $0x68] sm:$0xff] %vm746, %v727
      %761 = vst.msk [vmem:[#allocation2 + $0x70] sm:$0xff] %vm746, %v728
      %762 = vst.msk [vmem:[#allocation2 + $0x78] sm:$0xff] %vm746, %v729
      %763 = vst.msk [vmem:[#allocation2 + $0x80] sm:$0xff] %vm746, %v730
      %764 = vst.msk [vmem:[#allocation2 + $0x88] sm:$0xff] %vm746, %v731
      %765 = vst.msk [vmem:[#allocation2 + $0x90] sm:$0xff] %vm746, %v732
      %766 = vst.msk [vmem:[#allocation2 + $0x98] sm:$0xff] %vm746, %v733
      %767 = vst.msk [vmem:[#allocation2 + $0xa0] sm:$0xff] %vm746, %v734
      %768 = vst.msk [vmem:[#allocation2 + $0xa8] sm:$0xff] %vm746, %v735
      %769 = vst.msk [vmem:[#allocation2 + $0xb0] sm:$0xff] %vm746, %v736
      %770 = vst.msk [vmem:[#allocation2 + $0xb8] sm:$0xff] %vm746, %v737
      %771 = vst.msk [vmem:[#allocation2 + $0xc0] sm:$0xff] %vm746, %v738
      %772 = vst.msk [vmem:[#allocation2 + $0xc8] sm:$0xff] %vm746, %v739
      %773 = vst.msk [vmem:[#allocation2 + $0xd0] sm:$0xff] %vm746, %v740
      %774 = vst.msk [vmem:[#allocation2 + $0xd8] sm:$0xff] %vm746, %v741
      %775 = vst.msk [vmem:[#allocation2 + $0xe0] sm:$0xff] %vm746, %v742
      %776 = vst.msk [vmem:[#allocation2 + $0xe8] sm:$0xff] %vm746, %v743
      %777 = vst.msk [vmem:[#allocation2 + $0xf0] sm:$0xff] %vm746, %v744
      %778 = vst.msk [vmem:[#allocation2 + $0xf8] sm:$0xff] %vm746, %v745
      // Predicated region
      $region41: #{tpu_custom_call.1} parent=35 // pred_check
        %p779 = pneg %p301
      $region42: #{tpu_custom_call.1} parent=35 // pred_check_branch
        %781 = sbr.rel (%p779) target = $region44
      $region43: #{tpu_custom_call.1} parent=35 // pred_region
        %v782 = vld [vmem:[#allocation2] sm:$0xff]
        %v783 = vld [vmem:[#allocation2 + $0x8] sm:$0xff]
        %v784 = vld [vmem:[#allocation2 + $0x10] sm:$0xff]
        %v785 = vld [vmem:[#allocation2 + $0x18] sm:$0xff]
        %v786 = vld [vmem:[#allocation2 + $0x20] sm:$0xff]
        %v787 = vld [vmem:[#allocation2 + $0x28] sm:$0xff]
        %v788 = vld [vmem:[#allocation2 + $0x30] sm:$0xff]
        %v789 = vld [vmem:[#allocation2 + $0x38] sm:$0xff]
        %v790 = vld [vmem:[#allocation2 + $0x40] sm:$0xff]
        %v791 = vld [vmem:[#allocation2 + $0x48] sm:$0xff]
        %v792 = vld [vmem:[#allocation2 + $0x50] sm:$0xff]
        %v793 = vld [vmem:[#allocation2 + $0x58] sm:$0xff]
        %v794 = vld [vmem:[#allocation2 + $0x60] sm:$0xff]
        %v795 = vld [vmem:[#allocation2 + $0x68] sm:$0xff]
        %v796 = vld [vmem:[#allocation2 + $0x70] sm:$0xff]
        %v797 = vld [vmem:[#allocation2 + $0x78] sm:$0xff]
        %v798 = vld [vmem:[#allocation2 + $0x80] sm:$0xff]
        %v799 = vld [vmem:[#allocation2 + $0x88] sm:$0xff]
        %v800 = vld [vmem:[#allocation2 + $0x90] sm:$0xff]
        %v801 = vld [vmem:[#allocation2 + $0x98] sm:$0xff]
        %v802 = vld [vmem:[#allocation2 + $0xa0] sm:$0xff]
        %v803 = vld [vmem:[#allocation2 + $0xa8] sm:$0xff]
        %v804 = vld [vmem:[#allocation2 + $0xb0] sm:$0xff]
        %v805 = vld [vmem:[#allocation2 + $0xb8] sm:$0xff]
        %v806 = vld [vmem:[#allocation2 + $0xc0] sm:$0xff]
        %v807 = vld [vmem:[#allocation2 + $0xc8] sm:$0xff]
        %v808 = vld [vmem:[#allocation2 + $0xd0] sm:$0xff]
        %v809 = vld [vmem:[#allocation2 + $0xd8] sm:$0xff]
        %v810 = vld [vmem:[#allocation2 + $0xe0] sm:$0xff]
        %v811 = vld [vmem:[#allocation2 + $0xe8] sm:$0xff]
        %v812 = vld [vmem:[#allocation2 + $0xf0] sm:$0xff]
        %v813 = vld [vmem:[#allocation2 + $0xf8] sm:$0xff]
        %v814 = vld [vmem:[%s287] sm:$0x1]
        %v816 = vlaneseq
        %v817 = vshrl.u32 %v816, 7
        %v818 = vsub.s32 0, %v817
        %v819 = vrot.slane %v814, %v818
        %v821 = vmul.f32 %v782, %v819
        %v822 = vmul.f32 %v783, %v819
        %v823 = vmul.f32 %v784, %v819
        %v824 = vmul.f32 %v785, %v819
        %v825 = vmul.f32 %v786, %v819
        %v826 = vmul.f32 %v787, %v819
        %v827 = vmul.f32 %v788, %v819
        %v828 = vmul.f32 %v789, %v819
        %v829 = vmul.f32 %v790, %v819
        %v830 = vmul.f32 %v791, %v819
        %v831 = vmul.f32 %v792, %v819
        %v832 = vmul.f32 %v793, %v819
        %v833 = vmul.f32 %v794, %v819
        %v834 = vmul.f32 %v795, %v819
        %v835 = vmul.f32 %v796, %v819
        %v836 = vmul.f32 %v797, %v819
        %v837 = vmul.f32 %v798, %v819
        %v838 = vmul.f32 %v799, %v819
        %v839 = vmul.f32 %v800, %v819
        %v840 = vmul.f32 %v801, %v819
        %v841 = vmul.f32 %v802, %v819
        %v842 = vmul.f32 %v803, %v819
        %v843 = vmul.f32 %v804, %v819
        %v844 = vmul.f32 %v805, %v819
        %v845 = vmul.f32 %v806, %v819
        %v846 = vmul.f32 %v807, %v819
        %v847 = vmul.f32 %v808, %v819
        %v848 = vmul.f32 %v809, %v819
        %v849 = vmul.f32 %v810, %v819
        %v850 = vmul.f32 %v811, %v819
        %v851 = vmul.f32 %v812, %v819
        %v852 = vmul.f32 %v813, %v819
        %v853 = vld [vmem:[%s290] sm:$0x1]
        %v855 = vlaneseq
        %v856 = vshrl.u32 %v855, 7
        %v857 = vsub.s32 0, %v856
        %v858 = vrot.slane %v853, %v857
        %v860 = vadd.f32 %v821, %v858
        %v861 = vadd.f32 %v822, %v858
        %v862 = vadd.f32 %v823, %v858
        %v863 = vadd.f32 %v824, %v858
        %v864 = vadd.f32 %v825, %v858
        %v865 = vadd.f32 %v826, %v858
        %v866 = vadd.f32 %v827, %v858
        %v867 = vadd.f32 %v828, %v858
        %v868 = vadd.f32 %v829, %v858
        %v869 = vadd.f32 %v830, %v858
        %v870 = vadd.f32 %v831, %v858
        %v871 = vadd.f32 %v832, %v858
        %v872 = vadd.f32 %v833, %v858
        %v873 = vadd.f32 %v834, %v858
        %v874 = vadd.f32 %v835, %v858
        %v875 = vadd.f32 %v836, %v858
        %v876 = vadd.f32 %v837, %v858
        %v877 = vadd.f32 %v838, %v858
        %v878 = vadd.f32 %v839, %v858
        %v879 = vadd.f32 %v840, %v858
        %v880 = vadd.f32 %v841, %v858
        %v881 = vadd.f32 %v842, %v858
        %v882 = vadd.f32 %v843, %v858
        %v883 = vadd.f32 %v844, %v858
        %v884 = vadd.f32 %v845, %v858
        %v885 = vadd.f32 %v846, %v858
        %v886 = vadd.f32 %v847, %v858
        %v887 = vadd.f32 %v848, %v858
        %v888 = vadd.f32 %v849, %v858
        %v889 = vadd.f32 %v850, %v858
        %v890 = vadd.f32 %v851, %v858
        %v891 = vadd.f32 %v852, %v858
        %v892 = vmax.f32 %v860, 0.0
        %v893 = vmax.f32 %v861, 0.0
        %v894 = vmax.f32 %v862, 0.0
        %v895 = vmax.f32 %v863, 0.0
        %v896 = vmax.f32 %v864, 0.0
        %v897 = vmax.f32 %v865, 0.0
        %v898 = vmax.f32 %v866, 0.0
        %v899 = vmax.f32 %v867, 0.0
        %v900 = vmax.f32 %v868, 0.0
        %v901 = vmax.f32 %v869, 0.0
        %v902 = vmax.f32 %v870, 0.0
        %v903 = vmax.f32 %v871, 0.0
        %v904 = vmax.f32 %v872, 0.0
        %v905 = vmax.f32 %v873, 0.0
        %v906 = vmax.f32 %v874, 0.0
        %v907 = vmax.f32 %v875, 0.0
        %v908 = vmax.f32 %v876, 0.0
        %v909 = vmax.f32 %v877, 0.0
        %v910 = vmax.f32 %v878, 0.0
        %v911 = vmax.f32 %v879, 0.0
        %v912 = vmax.f32 %v880, 0.0
        %v913 = vmax.f32 %v881, 0.0
        %v914 = vmax.f32 %v882, 0.0
        %v915 = vmax.f32 %v883, 0.0
        %v916 = vmax.f32 %v884, 0.0
        %v917 = vmax.f32 %v885, 0.0
        %v918 = vmax.f32 %v886, 0.0
        %v919 = vmax.f32 %v887, 0.0
        %v920 = vmax.f32 %v888, 0.0
        %v921 = vmax.f32 %v889, 0.0
        %v922 = vmax.f32 %v890, 0.0
        %v923 = vmax.f32 %v891, 0.0
        %v924 = vpack.c.bf16 %v893, %v892
        %v925 = vpack.c.bf16 %v895, %v894
        %v926 = vpack.c.bf16 %v897, %v896
        %v927 = vpack.c.bf16 %v899, %v898
        %v928 = vpack.c.bf16 %v901, %v900
        %v929 = vpack.c.bf16 %v903, %v902
        %v930 = vpack.c.bf16 %v905, %v904
        %v931 = vpack.c.bf16 %v907, %v906
        %v932 = vpack.c.bf16 %v909, %v908
        %v933 = vpack.c.bf16 %v911, %v910
        %v934 = vpack.c.bf16 %v913, %v912
        %v935 = vpack.c.bf16 %v915, %v914
        %v936 = vpack.c.bf16 %v917, %v916
        %v937 = vpack.c.bf16 %v919, %v918
        %v938 = vpack.c.bf16 %v921, %v920
        %v939 = vpack.c.bf16 %v923, %v922
        %v956 = vunpack.c.l.b16 %v924
        %v957 = vunpack.c.h.b16 %v924
        %v958 = vunpack.c.l.b16 %v925
        %v959 = vunpack.c.h.b16 %v925
        %v960 = vunpack.c.l.b16 %v926
        %v961 = vunpack.c.h.b16 %v926
        %v962 = vunpack.c.l.b16 %v927
        %v963 = vunpack.c.h.b16 %v927
        %v964 = vunpack.c.l.b16 %v928
        %v965 = vunpack.c.h.b16 %v928
        %v966 = vunpack.c.l.b16 %v929
        %v967 = vunpack.c.h.b16 %v929
        %v968 = vunpack.c.l.b16 %v930
        %v969 = vunpack.c.h.b16 %v930
        %v970 = vunpack.c.l.b16 %v931
        %v971 = vunpack.c.h.b16 %v931
        %v972 = vunpack.c.l.b16 %v932
        %v973 = vunpack.c.h.b16 %v932
        %v974 = vunpack.c.l.b16 %v933
        %v975 = vunpack.c.h.b16 %v933
        %v976 = vunpack.c.l.b16 %v934
        %v977 = vunpack.c.h.b16 %v934
        %v978 = vunpack.c.l.b16 %v935
        %v979 = vunpack.c.h.b16 %v935
        %v980 = vunpack.c.l.b16 %v936
        %v981 = vunpack.c.h.b16 %v936
        %v982 = vunpack.c.l.b16 %v937
        %v983 = vunpack.c.h.b16 %v937
        %v984 = vunpack.c.l.b16 %v938
        %v985 = vunpack.c.h.b16 %v938
        %v986 = vunpack.c.l.b16 %v939
        %v987 = vunpack.c.h.b16 %v939
        %v988 = vpack.c.b16 %v956, %v956
        %v989 = vpack.c.b16 %v957, %v957
        %v990 = vpack.c.b16 %v958, %v958
        %v991 = vpack.c.b16 %v959, %v959
        %v992 = vpack.c.b16 %v960, %v960
        %v993 = vpack.c.b16 %v961, %v961
        %v994 = vpack.c.b16 %v962, %v962
        %v995 = vpack.c.b16 %v963, %v963
        %v996 = vpack.c.b16 %v964, %v964
        %v997 = vpack.c.b16 %v965, %v965
        %v998 = vpack.c.b16 %v966, %v966
        %v999 = vpack.c.b16 %v967, %v967
        %v1000 = vpack.c.b16 %v968, %v968
        %v1001 = vpack.c.b16 %v969, %v969
        %v1002 = vpack.c.b16 %v970, %v970
        %v1003 = vpack.c.b16 %v971, %v971
        %v1004 = vpack.c.b16 %v972, %v972
        %v1005 = vpack.c.b16 %v973, %v973
        %v1006 = vpack.c.b16 %v974, %v974
        %v1007 = vpack.c.b16 %v975, %v975
        %v1008 = vpack.c.b16 %v976, %v976
        %v1009 = vpack.c.b16 %v977, %v977
        %v1010 = vpack.c.b16 %v978, %v978
        %v1011 = vpack.c.b16 %v979, %v979
        %v1012 = vpack.c.b16 %v980, %v980
        %v1013 = vpack.c.b16 %v981, %v981
        %v1014 = vpack.c.b16 %v982, %v982
        %v1015 = vpack.c.b16 %v983, %v983
        %v1016 = vpack.c.b16 %v984, %v984
        %v1017 = vpack.c.b16 %v985, %v985
        %v1018 = vpack.c.b16 %v986, %v986
        %v1019 = vpack.c.b16 %v987, %v987
        %vm1052 = vcmask 519168
        %1053 = vst.msk [vmem:[%s298] sm:$0xf] %vm1052, %v988
        %1054 = vst.msk [vmem:[%s298 + $0x4] sm:$0xf] %vm1052, %v989
        %1055 = vst.msk [vmem:[%s298 + $0x8] sm:$0xf] %vm1052, %v990
        %1056 = vst.msk [vmem:[%s298 + $0xc] sm:$0xf] %vm1052, %v991
        %1057 = vst.msk [vmem:[%s298 + $0x10] sm:$0xf] %vm1052, %v992
        %1058 = vst.msk [vmem:[%s298 + $0x14] sm:$0xf] %vm1052, %v993
        %1059 = vst.msk [vmem:[%s298 + $0x18] sm:$0xf] %vm1052, %v994
        %1060 = vst.msk [vmem:[%s298 + $0x1c] sm:$0xf] %vm1052, %v995
        %1061 = vst.msk [vmem:[%s298 + $0x20] sm:$0xf] %vm1052, %v996
        %1062 = vst.msk [vmem:[%s298 + $0x24] sm:$0xf] %vm1052, %v997
        %1063 = vst.msk [vmem:[%s298 + $0x28] sm:$0xf] %vm1052, %v998
        %1064 = vst.msk [vmem:[%s298 + $0x2c] sm:$0xf] %vm1052, %v999
        %1065 = vst.msk [vmem:[%s298 + $0x30] sm:$0xf] %vm1052, %v1000
        %1066 = vst.msk [vmem:[%s298 + $0x34] sm:$0xf] %vm1052, %v1001
        %1067 = vst.msk [vmem:[%s298 + $0x38] sm:$0xf] %vm1052, %v1002
        %1068 = vst.msk [vmem:[%s298 + $0x3c] sm:$0xf] %vm1052, %v1003
        %1069 = vst.msk [vmem:[%s298 + $0x40] sm:$0xf] %vm1052, %v1004
        %1070 = vst.msk [vmem:[%s298 + $0x44] sm:$0xf] %vm1052, %v1005
        %1071 = vst.msk [vmem:[%s298 + $0x48] sm:$0xf] %vm1052, %v1006
        %1072 = vst.msk [vmem:[%s298 + $0x4c] sm:$0xf] %vm1052, %v1007
        %1073 = vst.msk [vmem:[%s298 + $0x50] sm:$0xf] %vm1052, %v1008
        %1074 = vst.msk [vmem:[%s298 + $0x54] sm:$0xf] %vm1052, %v1009
        %1075 = vst.msk [vmem:[%s298 + $0x58] sm:$0xf] %vm1052, %v1010
        %1076 = vst.msk [vmem:[%s298 + $0x5c] sm:$0xf] %vm1052, %v1011
        %1077 = vst.msk [vmem:[%s298 + $0x60] sm:$0xf] %vm1052, %v1012
        %1078 = vst.msk [vmem:[%s298 + $0x64] sm:$0xf] %vm1052, %v1013
        %1079 = vst.msk [vmem:[%s298 + $0x68] sm:$0xf] %vm1052, %v1014
        %1080 = vst.msk [vmem:[%s298 + $0x6c] sm:$0xf] %vm1052, %v1015
        %1081 = vst.msk [vmem:[%s298 + $0x70] sm:$0xf] %vm1052, %v1016
        %1082 = vst.msk [vmem:[%s298 + $0x74] sm:$0xf] %vm1052, %v1017
        %1083 = vst.msk [vmem:[%s298 + $0x78] sm:$0xf] %vm1052, %v1018
        %1084 = vst.msk [vmem:[%s298 + $0x7c] sm:$0xf] %vm1052, %v1019
      $region44: #{tpu_custom_call.1} parent=35 // pred_fallthru
        _
      %s1085 = smul.u32 32, %s20
      %p1086 = scmp.lt.s32.totalorder %s1085, 63
      %s1087 = scalar_select %p1086, %s1085, 63
      %p1088 = scmp.lt.s32.totalorder %s21, 0
      %s1089 = scalar_select %p1088, %s21, 0
      %s1090 = sadd.s32 %s1089, %s1087
      %s1091 = smul.addr %s1090, 4
      %s1092 = scalar_lea.vmem %s4, %s1091
      // Predicated region
      $region45: #{tpu_custom_call.1} parent=35 // pred_check
        %p1093 = pneg %p162
      $region46: #{tpu_custom_call.1} parent=35 // pred_check_branch
        %1095 = sbr.rel (%p1093) target = $region48
      $region47: #{tpu_custom_call.1} parent=35 // pred_region
        %s1096 = smul.u32 32, %s20
      $region48: #{tpu_custom_call.1} parent=35 // pred_fallthru
        _
    $region36: #{tpu_custom_call.1} parent=5 // pred_fallthru
      _
    %p1097 = scmp.le.s32.totalorder 2, %s10
    // Predicated region
    $region49: #{tpu_custom_call.1} parent=5 // pred_check
      %p1098 = pneg %p1097
    $region50: #{tpu_custom_call.1} parent=5 // pred_check_branch
      %1100 = sbr.rel (%p1098) target = $region52
    $region51: #{tpu_custom_call.1} parent=5 // pred_region
      %s1101 = ssub.s32 %s10, 2
      // Predicated region
      $region53: #{tpu_custom_call.1} parent=51 // pred_check
        %p1102 = pneg %p168
      $region54: #{tpu_custom_call.1} parent=51 // pred_check_branch
        %1104 = sbr.rel (%p1102) target = $region56
      $region55: #{tpu_custom_call.1} parent=51 // pred_region
        %s1105 = smul.u32 32, %s23
        %p1106 = scmp.lt.s32.totalorder %s1105, 63
        %s1107 = scalar_select %p1106, %s1105, 63
        %p1108 = scmp.lt.s32.totalorder %s24, 0
        %s1109 = scalar_select %p1108, %s24, 0
        %s1110 = sadd.s32 %s1109, %s1107
        %s1111 = smul.addr %s1110, 4
        %s1112 = scalar_lea.vmem %s4, %s1111
      $region56: #{tpu_custom_call.1} parent=51 // pred_fallthru
        _
    $region52: #{tpu_custom_call.1} parent=5 // pred_fallthru
      _
  $region6: #{tpu_custom_call.1} parent=0 // loop_footer
    %s14 = sadd.s32 1, %s10
  $region7: #{tpu_custom_call.1} parent=0 // loop_footer_branch
    %9 = sbr.rel target = $region3
  $region8: #{tpu_custom_call.1} parent=0 // loop_exit
    _

</llo_original>
